<compile_context>
chip_gen: v6e
topology: v6e:2x2x1
jax: 0.10.0
libtpu: 0.0.40
codegen_flags: <defaults>
</compile_context>

<pallas_src>
import jax
import jax.numpy as jnp
from jax.experimental import pallas as pl
from jax.experimental.pallas import tpu as pltpu


def _round_up(x, m):
    return ((x + m - 1) // m) * m


def _odefunc_kernel(t_ref, y_ref, e_ref, w1_ref, b1_ref, u_ref, w2_ref, b2_ref,
                    dy_ref, negdiv_ref):
    t = t_ref[0]                               # scalar time (SMEM)

    y = y_ref[...]                             # (TB, D), native dtype
    e = e_ref[...]                             # (TB, D)
    w1 = w1_ref[...]                           # (D, H)  VMEM-resident
    w2 = w2_ref[...]                           # (H, D)  VMEM-resident

    # Effective first-layer bias, folded once per tile: (1, H) f32.
    bias1 = (b1_ref[...] + t * u_ref[...]).astype(jnp.float32)

    # First layer: two independent dots against the resident W1 (no concat ->
    # no full-tile VMEM copies through the vld/vst slots).
    hy = jnp.dot(y, w1, preferred_element_type=jnp.float32) + bias1     # (TB, H)
    he = jnp.dot(e, w1, preferred_element_type=jnp.float32)             # (TB, H)

    # Elementwise path stays f32 (v5e has no bf16 VPU/EUP path; accuracy).
    a = jnp.tanh(hy)                           # (TB, H)
    gp = he * (1.0 - a * a)                    # (e W1) * tanh'(h)

    # Second layer: two dots against the resident W2, f32 accumulation.
    # TODO(synk): with bf16 W2 this downcasts a/gp before the matmul; the
    # Hutchinson-divergence tolerance should be re-validated for bf16 weights.
    dy = jnp.dot(a.astype(w2.dtype), w2, preferred_element_type=jnp.float32)
    dy = dy + b2_ref[...].astype(jnp.float32)
    je = jnp.dot(gp.astype(w2.dtype), w2, preferred_element_type=jnp.float32)

    dy_ref[...] = dy.astype(dy_ref.dtype)

    # Hutchinson estimate: div = sum(e * (J e), axis=-1), emitted as (TB, 1)
    # (full last-dim block; skips the per-tile lane relayout).
    div = jnp.sum(je * e.astype(jnp.float32), axis=-1, keepdims=True)
    negdiv_ref[...] = (-div).astype(negdiv_ref.dtype)


_VMEM_TILE_BUDGET = 16 * 1024 * 1024      # conservative across v5e/v6e/v7x


def _vmem_per_row(d, h, itemsize):
    # Pipeline streams per batch row: y, e inputs (double-buffered) + dy,
    # negdiv outputs (double-buffered).
    streams = 2 * (2 * d * itemsize) + 2 * (d * itemsize + 4)
    # f32 temporaries (concat-free): hy, he, a, gp (H each) + dy, je (D each).
    temps = (4 * h + 2 * d) * 4
    return streams + temps


def _weights_bytes(d, h, itemsize):
    # W1, W2, b1, u, b2 — single-buffered (constant index_map, pl.Buffered(1)).
    return (d * h + h * d + 2 * h + d) * itemsize


def _choose_tile_b(batch, d, h, itemsize):
    if batch <= 8:
        return batch                       # single block == full array (legal)
    per_row = _vmem_per_row(d, h, itemsize)
    avail = max(_VMEM_TILE_BUDGET - _weights_bytes(d, h, itemsize), 8 * per_row)
    tb = avail // per_row
    # Keep at least 2 tiles so the "parallel" batch axis can feed both
    # TensorCores on v7x; otherwise take the biggest tile the budget allows
    # (amortizes the ~0.35us per-grid-step overhead at small D).
    tb = min(tb, _round_up(pl.cdiv(batch, 2), 8))
    return max(8, (tb // 8) * 8)


def odefunc_forward(t, states, params, e):
    """Pallas implementation of ODEfunc.forward (divergence='approximate').

    Args:
      t: python float / scalar time.
      states: tuple; states[0] = y of shape (B, D); states[1] = logp
              accumulator; states[2:] get zeros_like in the output.
      params: dict with W1 (D,H), b1 (1,H), u (1,H), W2 (H,D), b2 (1,D).
      e: Hutchinson noise, same shape as y (the `self._e` buffer).

    Returns:
      (dy, -divergence) + tuple(zeros_like(x) for x in states[2:])
    """
    y = states[0]
    B, D = y.shape
    H = params["W1"].shape[1]
    itemsize = jnp.dtype(y.dtype).itemsize

    tile_b = _choose_tile_b(B, D, H, itemsize)
    grid = (pl.cdiv(B, tile_b),)           # ragged last block is masked by Pallas

    t_arr = jnp.asarray([t], dtype=jnp.float32)

    footprint = (_weights_bytes(D, H, itemsize)
                 + tile_b * _vmem_per_row(D, H, itemsize))
    vmem_limit = int(min(48 << 20, max(2 * footprint, 32 << 20)))

    cost = pl.CostEstimate(
        flops=8 * B * D * H,                               # four per-layer dots
        transcendentals=B * H,                             # tanh
        bytes_accessed=(3 * B * D * itemsize               # y, e in; dy out
                        + B * 4                            # -div out
                        + _weights_bytes(D, H, itemsize)), # weights (once)
    )

    smem = pl.BlockSpec(memory_space=pltpu.MemorySpace.SMEM)
    resident = pl.Buffered(1)              # constant-index weights: 1 VMEM buffer

    dy, negdiv = pl.pallas_call(
        _odefunc_kernel,
        grid=grid,
        in_specs=[
            smem,                                                            # t
            pl.BlockSpec((tile_b, D), lambda i: (i, 0)),                     # y
            pl.BlockSpec((tile_b, D), lambda i: (i, 0)),                     # e
            pl.BlockSpec((D, H), lambda i: (0, 0), pipeline_mode=resident),  # W1
            pl.BlockSpec((1, H), lambda i: (0, 0), pipeline_mode=resident),  # b1
            pl.BlockSpec((1, H), lambda i: (0, 0), pipeline_mode=resident),  # u
            pl.BlockSpec((H, D), lambda i: (0, 0), pipeline_mode=resident),  # W2
            pl.BlockSpec((1, D), lambda i: (0, 0), pipeline_mode=resident),  # b2
        ],
        out_specs=(
            pl.BlockSpec((tile_b, D), lambda i: (i, 0)),                     # dy
            pl.BlockSpec((tile_b, 1), lambda i: (i, 0)),                     # -div
        ),
        out_shape=(
            jax.ShapeDtypeStruct((B, D), y.dtype),
            jax.ShapeDtypeStruct((B, 1), jnp.float32),
        ),
        compiler_params=pltpu.CompilerParams(
            dimension_semantics=("parallel",),     # shard batch over v7x's 2 TCs
            vmem_limit_bytes=vmem_limit,
        ),
        cost_estimate=cost,
    )(t_arr, y, e, params["W1"], params["b1"], params["u"],
      params["W2"], params["b2"])

    extras = tuple(jnp.zeros_like(x) for x in states[2:])
    return (dy, negdiv) + extras


def _reference(t, states, params, e):
    """Pure-JAX reference for the same math (correctness check)."""
    y = states[0].astype(jnp.float32)
    ef = e.astype(jnp.float32)
    h = y @ params["W1"] + params["b1"] + jnp.float32(t) * params["u"]
    a = jnp.tanh(h)
    dy = a @ params["W2"] + params["b2"]
    je = ((ef @ params["W1"]) * (1.0 - a * a)) @ params["W2"]
    div = jnp.sum(je * ef, axis=-1, keepdims=True)
    return dy, -div


if __name__ == "__main__":
    # B deliberately not a multiple of the 8-row tile so the ragged-last-block
    # (masked) path and the 2-tile "parallel" grid are both exercised.
    B, D, H = 12, 32, 64

    key = jax.random.PRNGKey(0)
    k_y, k_e, k_w1, k_w2, k_b1, k_b2, k_u = jax.random.split(key, 7)

    y = jax.random.normal(k_y, (B, D), dtype=jnp.float32)
    logp = jnp.zeros((B, 1), dtype=jnp.float32)
    states = (y, logp)

    # self._e (Hutchinson noise, gaussian since rademacher=False)
    e = jax.random.normal(k_e, (B, D), dtype=jnp.float32)

    params = {
        "W1": jax.random.normal(k_w1, (D, H), dtype=jnp.float32) * 0.1,
        "b1": jax.random.normal(k_b1, (1, H), dtype=jnp.float32) * 0.01,
        "u": jax.random.normal(k_u, (1, H), dtype=jnp.float32) * 0.1,
        "W2": jax.random.normal(k_w2, (H, D), dtype=jnp.float32) * 0.1,
        "b2": jax.random.normal(k_b2, (1, D), dtype=jnp.float32) * 0.01,
    }

    t = 0.5
    out = odefunc_forward(t, states, params, e)
    out = jax.block_until_ready(out)

    dy_ref, negdiv_ref = _reference(t, states, params, e)
    assert out[0].shape == (B, D) and out[1].shape == (B, 1)
    assert jnp.allclose(out[0], dy_ref, atol=1e-5, rtol=1e-5)
    assert jnp.allclose(out[1], negdiv_ref, atol=1e-5, rtol=1e-5)

    print("KERNEL_OK")
</pallas_src>

<mosaic_0001>
module attributes {stable_mosaic.version = 11 : i64} {
  func.func @_odefunc_kernel(%arg0: i32, %arg1: memref<1xf32, #tpu.memory_space<smem>>, %arg2: memref<8x32xf32, #tpu.memory_space<vmem>>, %arg3: memref<8x32xf32, #tpu.memory_space<vmem>>, %arg4: memref<32x64xf32, #tpu.memory_space<vmem>>, %arg5: memref<1x64xf32, #tpu.memory_space<vmem>>, %arg6: memref<1x64xf32, #tpu.memory_space<vmem>>, %arg7: memref<64x32xf32, #tpu.memory_space<vmem>>, %arg8: memref<1x32xf32, #tpu.memory_space<vmem>>, %arg9: memref<8x32xf32, #tpu.memory_space<vmem>>, %arg10: memref<8x1xf32, #tpu.memory_space<vmem>>) attributes {dimension_semantics = [#tpu.dimension_semantics<parallel>], iteration_bounds = array<i64: 2>, scalar_prefetch = 0 : i64, scratch_operands = 0 : i64, tpu.core_type = #tpu.core_type<tc>, window_params = [{transform_indices = @transform_0, window_bounds = array<i64: 1>}, {transform_indices = @transform_1, window_bounds = array<i64: 8, 32>}, {transform_indices = @transform_2, window_bounds = array<i64: 8, 32>}, {pipeline_mode = #tpu.pipeline_mode<synchronous>, transform_indices = @transform_3, window_bounds = array<i64: 32, 64>}, {pipeline_mode = #tpu.pipeline_mode<synchronous>, transform_indices = @transform_4, window_bounds = array<i64: 1, 64>}, {pipeline_mode = #tpu.pipeline_mode<synchronous>, transform_indices = @transform_5, window_bounds = array<i64: 1, 64>}, {pipeline_mode = #tpu.pipeline_mode<synchronous>, transform_indices = @transform_6, window_bounds = array<i64: 64, 32>}, {pipeline_mode = #tpu.pipeline_mode<synchronous>, transform_indices = @transform_7, window_bounds = array<i64: 1, 32>}, {transform_indices = @transform_8, window_bounds = array<i64: 8, 32>}, {transform_indices = @transform_9, window_bounds = array<i64: 8, 1>}]} {
    %c0 = arith.constant 0 : index
    %0 = memref.load %arg1[%c0] : memref<1xf32, #tpu.memory_space<smem>>
    %c0_0 = arith.constant 0 : index
    %c0_1 = arith.constant 0 : index
    %1 = vector.load %arg2[%c0_0, %c0_1] : memref<8x32xf32, #tpu.memory_space<vmem>>, vector<8x32xf32>
    %c0_2 = arith.constant 0 : index
    %c0_3 = arith.constant 0 : index
    %2 = vector.load %arg3[%c0_2, %c0_3] : memref<8x32xf32, #tpu.memory_space<vmem>>, vector<8x32xf32>
    %c0_4 = arith.constant 0 : index
    %c0_5 = arith.constant 0 : index
    %3 = vector.load %arg4[%c0_4, %c0_5] : memref<32x64xf32, #tpu.memory_space<vmem>>, vector<32x64xf32>
    %c0_6 = arith.constant 0 : index
    %c0_7 = arith.constant 0 : index
    %4 = vector.load %arg7[%c0_6, %c0_7] : memref<64x32xf32, #tpu.memory_space<vmem>>, vector<64x32xf32>
    %c0_8 = arith.constant 0 : index
    %c0_9 = arith.constant 0 : index
    %5 = vector.load %arg5[%c0_8, %c0_9] : memref<1x64xf32, #tpu.memory_space<vmem>>, vector<1x64xf32>
    %c0_10 = arith.constant 0 : index
    %c0_11 = arith.constant 0 : index
    %6 = vector.load %arg6[%c0_10, %c0_11] : memref<1x64xf32, #tpu.memory_space<vmem>>, vector<1x64xf32>
    %7 = vector.broadcast %0 : f32 to vector<1x64xf32>
    %8 = arith.mulf %7, %6 : vector<1x64xf32>
    %9 = arith.addf %5, %8 : vector<1x64xf32>
    %cst = arith.constant dense<0.000000e+00> : vector<8x64xf32>
    %10 = tpu.matmul %1, %3, %cst {dimension_numbers = #tpu.dot_dimension_numbers<[1], [0], [0], [1], [0, 0, 1, 1], [], []>} : vector<8x32xf32>, vector<32x64xf32>, vector<8x64xf32> -> vector<8x64xf32>
    %11 = vector.broadcast %9 : vector<1x64xf32> to vector<8x64xf32>
    %12 = arith.addf %10, %11 : vector<8x64xf32>
    %cst_12 = arith.constant dense<0.000000e+00> : vector<8x64xf32>
    %13 = tpu.matmul %2, %3, %cst_12 {dimension_numbers = #tpu.dot_dimension_numbers<[1], [0], [0], [1], [0, 0, 1, 1], [], []>} : vector<8x32xf32>, vector<32x64xf32>, vector<8x64xf32> -> vector<8x64xf32>
    %14 = math.tanh %12 : vector<8x64xf32>
    %15 = arith.mulf %14, %14 : vector<8x64xf32>
    %cst_13 = arith.constant 1.000000e+00 : f32
    %16 = vector.broadcast %cst_13 : f32 to vector<8x64xf32>
    %17 = arith.subf %16, %15 : vector<8x64xf32>
    %18 = arith.mulf %13, %17 : vector<8x64xf32>
    %cst_14 = arith.constant dense<0.000000e+00> : vector<8x32xf32>
    %19 = tpu.matmul %14, %4, %cst_14 {dimension_numbers = #tpu.dot_dimension_numbers<[1], [0], [0], [1], [0, 0, 1, 1], [], []>} : vector<8x64xf32>, vector<64x32xf32>, vector<8x32xf32> -> vector<8x32xf32>
    %c0_15 = arith.constant 0 : index
    %c0_16 = arith.constant 0 : index
    %20 = vector.load %arg8[%c0_15, %c0_16] : memref<1x32xf32, #tpu.memory_space<vmem>>, vector<1x32xf32>
    %21 = vector.broadcast %20 : vector<1x32xf32> to vector<8x32xf32>
    %22 = arith.addf %19, %21 : vector<8x32xf32>
    %cst_17 = arith.constant dense<0.000000e+00> : vector<8x32xf32>
    %23 = tpu.matmul %18, %4, %cst_17 {dimension_numbers = #tpu.dot_dimension_numbers<[1], [0], [0], [1], [0, 0, 1, 1], [], []>} : vector<8x64xf32>, vector<64x32xf32>, vector<8x32xf32> -> vector<8x32xf32>
    %c0_18 = arith.constant 0 : index
    %c0_19 = arith.constant 0 : index
    %24 = vector.load %arg9[%c0_18, %c0_19] : memref<8x32xf32, #tpu.memory_space<vmem>>, vector<8x32xf32>
    tpu.vector_store %arg9[%c0_18, %c0_19], %22 {strides = array<i32>} : memref<8x32xf32, #tpu.memory_space<vmem>>, vector<8x32xf32>,
    %25 = arith.mulf %23, %2 : vector<8x32xf32>
    %cst_20 = arith.constant dense<0.000000e+00> : vector<8xf32>
    %26 = vector.multi_reduction <add>, %25, %cst_20 [1] : vector<8x32xf32> to vector<8xf32>
    %27 = vector.shape_cast %26 : vector<8xf32> to vector<8x1xf32>
    %cst_21 = arith.constant 0.000000e+00 : f32
    %28 = vector.broadcast %cst_21 : f32 to vector<8x1xf32>
    %29 = arith.subf %28, %27 : vector<8x1xf32>
    %c0_22 = arith.constant 0 : index
    %c0_23 = arith.constant 0 : index
    %30 = vector.load %arg10[%c0_22, %c0_23] : memref<8x1xf32, #tpu.memory_space<vmem>>, vector<8x1xf32>
    tpu.vector_store %arg10[%c0_22, %c0_23], %29 {strides = array<i32>} : memref<8x1xf32, #tpu.memory_space<vmem>>, vector<8x1xf32>,
    return
  }
  func.func @transform_0(%arg0: i32) -> i32 {
    %c0_i32 = arith.constant 0 : i32
    %c0_i32_0 = arith.constant 0 : i32
    return %c0_i32 : i32
  }
  func.func @transform_1(%arg0: i32) -> (i32, i32) {
    %c0_i32 = arith.constant 0 : i32
    %c0_i32_0 = arith.constant 0 : i32
    return %arg0, %c0_i32 : i32, i32
  }
  func.func @transform_2(%arg0: i32) -> (i32, i32) {
    %c0_i32 = arith.constant 0 : i32
    %c0_i32_0 = arith.constant 0 : i32
    return %arg0, %c0_i32 : i32, i32
  }
  func.func @transform_3(%arg0: i32) -> (i32, i32) {
    %c0_i32 = arith.constant 0 : i32
    %c0_i32_0 = arith.constant 0 : i32
    %c0_i32_1 = arith.constant 0 : i32
    return %c0_i32, %c0_i32_0 : i32, i32
  }
  func.func @transform_4(%arg0: i32) -> (i32, i32) {
    %c0_i32 = arith.constant 0 : i32
    %c0_i32_0 = arith.constant 0 : i32
    %c0_i32_1 = arith.constant 0 : i32
    return %c0_i32, %c0_i32_0 : i32, i32
  }
  func.func @transform_5(%arg0: i32) -> (i32, i32) {
    %c0_i32 = arith.constant 0 : i32
    %c0_i32_0 = arith.constant 0 : i32
    %c0_i32_1 = arith.constant 0 : i32
    return %c0_i32, %c0_i32_0 : i32, i32
  }
  func.func @transform_6(%arg0: i32) -> (i32, i32) {
    %c0_i32 = arith.constant 0 : i32
    %c0_i32_0 = arith.constant 0 : i32
    %c0_i32_1 = arith.constant 0 : i32
    return %c0_i32, %c0_i32_0 : i32, i32
  }
  func.func @transform_7(%arg0: i32) -> (i32, i32) {
    %c0_i32 = arith.constant 0 : i32
    %c0_i32_0 = arith.constant 0 : i32
    %c0_i32_1 = arith.constant 0 : i32
    return %c0_i32, %c0_i32_0 : i32, i32
  }
  func.func @transform_8(%arg0: i32) -> (i32, i32) {
    %c0_i32 = arith.constant 0 : i32
    %c0_i32_0 = arith.constant 0 : i32
    return %arg0, %c0_i32 : i32, i32
  }
  func.func @transform_9(%arg0: i32) -> (i32, i32) {
    %c0_i32 = arith.constant 0 : i32
    %c0_i32_0 = arith.constant 0 : i32
    return %arg0, %c0_i32 : i32, i32
  }
}

</mosaic_0001>

<llo_original>
// kernel: tpu_custom_call.1
$region0: #{tpu_custom_call.1}
  #allocation0 [shape = 'u32[]', space=smem, size = 0x4, offset = 0x4, fixed_abs, tag = 'smem constant byte address 0x4 - core index']
  #allocation1 [shape = 'u32[144,128]{1,0:T(1,128)}', space=vmem, size = 0x12000, scoped, tag = 'internal scratch']
  #allocation2 [shape = 'f32[1]{0:T(128)S(6)}', space=smem, size = 0x200, scoped, tag = 'scoped memory for tpu_custom_call.1']
  %s0 = inlined_call_operand.<no memory space> [shape: f32[1], index: 0, kind: input, shape index: {}]
  %s1 = inlined_call_operand.vmem [shape: f32[12,32], index: 1, kind: input, shape index: {}]
  %s2 = inlined_call_operand.vmem [shape: f32[12,32], index: 2, kind: input, shape index: {}]
  %s3 = inlined_call_operand.vmem [shape: f32[32,64], index: 3, kind: input, shape index: {}]
  %s4 = inlined_call_operand.vmem [shape: f32[1,64], index: 4, kind: input, shape index: {}]
  %s5 = inlined_call_operand.vmem [shape: f32[1,64], index: 5, kind: input, shape index: {}]
  %s6 = inlined_call_operand.vmem [shape: f32[64,32], index: 6, kind: input, shape index: {}]
  %s7 = inlined_call_operand.vmem [shape: f32[1,32], index: 7, kind: input, shape index: {}]
  %s8 = inlined_call_operand.hbm [shape: f32[12,32], index: 8, kind: output, shape index: {0}]
  %s9 = inlined_call_operand.vmem [shape: f32[12,1], index: 9, kind: output, shape index: {1}]
  %10 = xla_tuple %s8, %s9
  %s11 = sld [smem:[#allocation0]]
  $region73: #{tpu_custom_call.1} parent=0
    _
  %s13 = ssub.s32 1, %s11
  %s14 = scalar_select 0, %s13, %s11
  %15 = sst [smem:[#allocation2]] %s0
  $region1: #{tpu_custom_call.1} parent=0
    #allocation3 [shape = 'u8[8192]{0}', space=vmem, size = 0x2000, scoped, tag = 'output window, operand 0']
    #allocation4 [shape = 's32[2]{0}', space=sflag, size = 0x8, scoped, tag = 'scoped memory for tpu_custom_call.1']
    %16 = vsyncpa [#allocation4], 0
    %s17 = scalar_lea.sflag [#allocation4], 1
    %18 = vsyncpa %s17, 0
    loop: start=0, step=1, limit=4
    $region2: #{tpu_custom_call.1} parent=1 // loop_pre_header
      _
    $region3: #{tpu_custom_call.1} parent=1 // loop_header
      %s20 = sphi 0, %s24
      %p21 = scmp.ge.s32.totalorder %s20, 4
      %s28 = sphi 0, %s28
      %s30 = sphi 0, %s28
      %s31 = sphi 0, %s30
      %s45 = sphi 0, %s31
      %s51 = sphi 0, %s53
      %s54 = sphi 0, %s51
      %s55 = sphi 0, %s54
      %s71 = sphi 0, %s55
      %s77 = sphi 0, %s79
      %s80 = sphi 0, %s77
      %s81 = sphi 0, %s80
      %s97 = sphi 0, %s81
      %s101 = sphi 0, %s101
      %s103 = sphi 0, %s101
      %s104 = sphi 0, %s103
      %s118 = sphi 0, %s104
      %s122 = sphi 0, %s122
      %s124 = sphi 0, %s122
      %s125 = sphi 0, %s124
      %s139 = sphi 0, %s125
      %s143 = sphi 0, %s143
      %s145 = sphi 0, %s143
      %s146 = sphi 0, %s145
      %s160 = sphi 0, %s146
      %s164 = sphi 0, %s164
      %s166 = sphi 0, %s164
      %s167 = sphi 0, %s166
      %s181 = sphi 0, %s167
      %s185 = sphi 0, %s185
      %s187 = sphi 0, %s185
      %s188 = sphi 0, %s187
      %s202 = sphi 0, %s188
      %s208 = sphi 0, %s210
      %s211 = sphi 0, %s208
      %s212 = sphi 0, %s211
      %s228 = sphi 0, %s212
      %s234 = sphi 0, %s236
      %s237 = sphi 0, %s234
      %s238 = sphi 0, %s237
      %s254 = sphi 0, %s238
    $region4: #{tpu_custom_call.1} parent=1 // loop_header_branch
      %23 = sbr.rel (%p21) target = $region8
    $region5: #{tpu_custom_call.1} parent=1 // loop_body
      %s25 = ssub.s32 %s20, 1
      %s26 = ssub.s32 %s20, 2
      %s27 = sadd.s32 %s20, 1
      %s29 = sadd.s32 %s28, 1
      %p32 = scmp.eq.s32.totalorder %s20, 1
      %p33 = scmp.ne.s32.totalorder %s28, %s30
      %p34 = scmp.eq.s32.totalorder %s20, 0
      %p35 = por %p33, %p34
      %p36 = scmp.ne.s32.totalorder %s28, %s30
      %p37 = scmp.eq.s32.totalorder %s25, 1
      %p38 = por %p36, %p37
      %p39 = scmp.ne.s32.totalorder %s30, %s31
      %p40 = scmp.eq.s32.totalorder %s25, 0
      %p41 = por %p39, %p40
      %p42 = scmp.ne.s32.totalorder %s30, %s31
      %p43 = scmp.eq.s32.totalorder %s26, 1
      %p44 = por %p42, %p43
      %p46 = scmp.ne.s32.totalorder %s31, %s45
      %p47 = scmp.eq.s32.totalorder %s26, 0
      %p48 = por %p46, %p47
      %s49 = ssub.s32 %s20, %s27
      %p50 = scmp.eq.s32.totalorder %s49, 0
      %s52 = sadd.s32 %s51, 1
      %s53 = scalar_select %p50, %s51, %s52
      %p56 = pneg %p50
      %p57 = scmp.eq.s32.totalorder %s20, 1
      %p58 = por %p56, %p57
      %p59 = scmp.ne.s32.totalorder %s51, %s54
      %p60 = scmp.eq.s32.totalorder %s20, 0
      %p61 = por %p59, %p60
      %p62 = scmp.ne.s32.totalorder %s51, %s54
      %p63 = scmp.eq.s32.totalorder %s25, 1
      %p64 = por %p62, %p63
      %p65 = scmp.ne.s32.totalorder %s54, %s55
      %p66 = scmp.eq.s32.totalorder %s25, 0
      %p67 = por %p65, %p66
      %p68 = scmp.ne.s32.totalorder %s54, %s55
      %p69 = scmp.eq.s32.totalorder %s26, 1
      %p70 = por %p68, %p69
      %p72 = scmp.ne.s32.totalorder %s55, %s71
      %p73 = scmp.eq.s32.totalorder %s26, 0
      %p74 = por %p72, %p73
      %s75 = ssub.s32 %s20, %s27
      %p76 = scmp.eq.s32.totalorder %s75, 0
      %s78 = sadd.s32 %s77, 1
      %s79 = scalar_select %p76, %s77, %s78
      %p82 = pneg %p76
      %p83 = scmp.eq.s32.totalorder %s20, 1
      %p84 = por %p82, %p83
      %p85 = scmp.ne.s32.totalorder %s77, %s80
      %p86 = scmp.eq.s32.totalorder %s20, 0
      %p87 = por %p85, %p86
      %p88 = scmp.ne.s32.totalorder %s77, %s80
      %p89 = scmp.eq.s32.totalorder %s25, 1
      %p90 = por %p88, %p89
      %p91 = scmp.ne.s32.totalorder %s80, %s81
      %p92 = scmp.eq.s32.totalorder %s25, 0
      %p93 = por %p91, %p92
      %p94 = scmp.ne.s32.totalorder %s80, %s81
      %p95 = scmp.eq.s32.totalorder %s26, 1
      %p96 = por %p94, %p95
      %p98 = scmp.ne.s32.totalorder %s81, %s97
      %p99 = scmp.eq.s32.totalorder %s26, 0
      %p100 = por %p98, %p99
      %s102 = sadd.s32 %s101, 1
      %p105 = scmp.eq.s32.totalorder %s20, 1
      %p106 = scmp.ne.s32.totalorder %s101, %s103
      %p107 = scmp.eq.s32.totalorder %s20, 0
      %p108 = por %p106, %p107
      %p109 = scmp.ne.s32.totalorder %s101, %s103
      %p110 = scmp.eq.s32.totalorder %s25, 1
      %p111 = por %p109, %p110
      %p112 = scmp.ne.s32.totalorder %s103, %s104
      %p113 = scmp.eq.s32.totalorder %s25, 0
      %p114 = por %p112, %p113
      %p115 = scmp.ne.s32.totalorder %s103, %s104
      %p116 = scmp.eq.s32.totalorder %s26, 1
      %p117 = por %p115, %p116
      %p119 = scmp.ne.s32.totalorder %s104, %s118
      %p120 = scmp.eq.s32.totalorder %s26, 0
      %p121 = por %p119, %p120
      %s123 = sadd.s32 %s122, 1
      %p126 = scmp.eq.s32.totalorder %s20, 1
      %p127 = scmp.ne.s32.totalorder %s122, %s124
      %p128 = scmp.eq.s32.totalorder %s20, 0
      %p129 = por %p127, %p128
      %p130 = scmp.ne.s32.totalorder %s122, %s124
      %p131 = scmp.eq.s32.totalorder %s25, 1
      %p132 = por %p130, %p131
      %p133 = scmp.ne.s32.totalorder %s124, %s125
      %p134 = scmp.eq.s32.totalorder %s25, 0
      %p135 = por %p133, %p134
      %p136 = scmp.ne.s32.totalorder %s124, %s125
      %p137 = scmp.eq.s32.totalorder %s26, 1
      %p138 = por %p136, %p137
      %p140 = scmp.ne.s32.totalorder %s125, %s139
      %p141 = scmp.eq.s32.totalorder %s26, 0
      %p142 = por %p140, %p141
      %s144 = sadd.s32 %s143, 1
      %p147 = scmp.eq.s32.totalorder %s20, 1
      %p148 = scmp.ne.s32.totalorder %s143, %s145
      %p149 = scmp.eq.s32.totalorder %s20, 0
      %p150 = por %p148, %p149
      %p151 = scmp.ne.s32.totalorder %s143, %s145
      %p152 = scmp.eq.s32.totalorder %s25, 1
      %p153 = por %p151, %p152
      %p154 = scmp.ne.s32.totalorder %s145, %s146
      %p155 = scmp.eq.s32.totalorder %s25, 0
      %p156 = por %p154, %p155
      %p157 = scmp.ne.s32.totalorder %s145, %s146
      %p158 = scmp.eq.s32.totalorder %s26, 1
      %p159 = por %p157, %p158
      %p161 = scmp.ne.s32.totalorder %s146, %s160
      %p162 = scmp.eq.s32.totalorder %s26, 0
      %p163 = por %p161, %p162
      %s165 = sadd.s32 %s164, 1
      %p168 = scmp.eq.s32.totalorder %s20, 1
      %p169 = scmp.ne.s32.totalorder %s164, %s166
      %p170 = scmp.eq.s32.totalorder %s20, 0
      %p171 = por %p169, %p170
      %p172 = scmp.ne.s32.totalorder %s164, %s166
      %p173 = scmp.eq.s32.totalorder %s25, 1
      %p174 = por %p172, %p173
      %p175 = scmp.ne.s32.totalorder %s166, %s167
      %p176 = scmp.eq.s32.totalorder %s25, 0
      %p177 = por %p175, %p176
      %p178 = scmp.ne.s32.totalorder %s166, %s167
      %p179 = scmp.eq.s32.totalorder %s26, 1
      %p180 = por %p178, %p179
      %p182 = scmp.ne.s32.totalorder %s167, %s181
      %p183 = scmp.eq.s32.totalorder %s26, 0
      %p184 = por %p182, %p183
      %s186 = sadd.s32 %s185, 1
      %p189 = scmp.eq.s32.totalorder %s20, 1
      %p190 = scmp.ne.s32.totalorder %s185, %s187
      %p191 = scmp.eq.s32.totalorder %s20, 0
      %p192 = por %p190, %p191
      %p193 = scmp.ne.s32.totalorder %s185, %s187
      %p194 = scmp.eq.s32.totalorder %s25, 1
      %p195 = por %p193, %p194
      %p196 = scmp.ne.s32.totalorder %s187, %s188
      %p197 = scmp.eq.s32.totalorder %s25, 0
      %p198 = por %p196, %p197
      %p199 = scmp.ne.s32.totalorder %s187, %s188
      %p200 = scmp.eq.s32.totalorder %s26, 1
      %p201 = por %p199, %p200
      %p203 = scmp.ne.s32.totalorder %s188, %s202
      %p204 = scmp.eq.s32.totalorder %s26, 0
      %p205 = por %p203, %p204
      %s206 = ssub.s32 %s20, %s27
      %p207 = scmp.eq.s32.totalorder %s206, 0
      %s209 = sadd.s32 %s208, 1
      %s210 = scalar_select %p207, %s208, %s209
      %p213 = pneg %p207
      %p214 = scmp.eq.s32.totalorder %s20, 1
      %p215 = por %p213, %p214
      %p216 = scmp.ne.s32.totalorder %s208, %s211
      %p217 = scmp.eq.s32.totalorder %s20, 0
      %p218 = por %p216, %p217
      %p219 = scmp.ne.s32.totalorder %s208, %s211
      %p220 = scmp.eq.s32.totalorder %s25, 1
      %p221 = por %p219, %p220
      %p222 = scmp.ne.s32.totalorder %s211, %s212
      %p223 = scmp.eq.s32.totalorder %s25, 0
      %p224 = por %p222, %p223
      %p225 = scmp.ne.s32.totalorder %s211, %s212
      %p226 = scmp.eq.s32.totalorder %s26, 1
      %p227 = por %p225, %p226
      %p229 = scmp.ne.s32.totalorder %s212, %s228
      %p230 = scmp.eq.s32.totalorder %s26, 0
      %p231 = por %p229, %p230
      %s232 = ssub.s32 %s20, %s27
      %p233 = scmp.eq.s32.totalorder %s232, 0
      %s235 = sadd.s32 %s234, 1
      %s236 = scalar_select %p233, %s234, %s235
      %p239 = pneg %p233
      %p240 = scmp.eq.s32.totalorder %s20, 1
      %p241 = por %p239, %p240
      %p242 = scmp.ne.s32.totalorder %s234, %s237
      %p243 = scmp.eq.s32.totalorder %s20, 0
      %p244 = por %p242, %p243
      %p245 = scmp.ne.s32.totalorder %s234, %s237
      %p246 = scmp.eq.s32.totalorder %s25, 1
      %p247 = por %p245, %p246
      %p248 = scmp.ne.s32.totalorder %s237, %s238
      %p249 = scmp.eq.s32.totalorder %s25, 0
      %p250 = por %p248, %p249
      %p251 = scmp.ne.s32.totalorder %s237, %s238
      %p252 = scmp.eq.s32.totalorder %s26, 1
      %p253 = por %p251, %p252
      %p255 = scmp.ne.s32.totalorder %s238, %s254
      %p256 = scmp.eq.s32.totalorder %s26, 0
      %p257 = por %p255, %p256
      %p258 = scmp.le.s32.totalorder 1, %s20
      %p259 = scmp.lt.s32.totalorder %s20, 3
      %p260 = pnand %p258, %p259
      %p261 = pneg %p260
      // Predicated region
      $region9: #{tpu_custom_call.1} parent=5 // pred_check
        _
      $region10: #{tpu_custom_call.1} parent=5 // pred_check_branch
        %263 = sbr.rel (%p260) target = $region12
      $region11: #{tpu_custom_call.1} parent=5 // pred_region
        %s264 = ssub.s32 %s20, 1
        // Predicated region
        $region13: #{tpu_custom_call.1} parent=11 // pred_check
          %p265 = pneg %p41
        $region14: #{tpu_custom_call.1} parent=11 // pred_check_branch
          %267 = sbr.rel (%p265) target = $region16
        $region15: #{tpu_custom_call.1} parent=11 // pred_region
          _
        $region16: #{tpu_custom_call.1} parent=11 // pred_fallthru
          _
        // Predicated region
        $region17: #{tpu_custom_call.1} parent=11 // pred_check
          %p268 = pneg %p114
        $region18: #{tpu_custom_call.1} parent=11 // pred_check_branch
          %270 = sbr.rel (%p268) target = $region20
        $region19: #{tpu_custom_call.1} parent=11 // pred_region
          _
        $region20: #{tpu_custom_call.1} parent=11 // pred_fallthru
          _
        // Predicated region
        $region21: #{tpu_custom_call.1} parent=11 // pred_check
          %p271 = pneg %p135
        $region22: #{tpu_custom_call.1} parent=11 // pred_check_branch
          %273 = sbr.rel (%p271) target = $region24
        $region23: #{tpu_custom_call.1} parent=11 // pred_region
          _
        $region24: #{tpu_custom_call.1} parent=11 // pred_fallthru
          _
        // Predicated region
        $region25: #{tpu_custom_call.1} parent=11 // pred_check
          %p274 = pneg %p156
        $region26: #{tpu_custom_call.1} parent=11 // pred_check_branch
          %276 = sbr.rel (%p274) target = $region28
        $region27: #{tpu_custom_call.1} parent=11 // pred_region
          _
        $region28: #{tpu_custom_call.1} parent=11 // pred_fallthru
          _
        // Predicated region
        $region29: #{tpu_custom_call.1} parent=11 // pred_check
          %p277 = pneg %p177
        $region30: #{tpu_custom_call.1} parent=11 // pred_check_branch
          %279 = sbr.rel (%p277) target = $region32
        $region31: #{tpu_custom_call.1} parent=11 // pred_region
          _
        $region32: #{tpu_custom_call.1} parent=11 // pred_fallthru
          _
        // Predicated region
        $region33: #{tpu_custom_call.1} parent=11 // pred_check
          %p280 = pneg %p198
        $region34: #{tpu_custom_call.1} parent=11 // pred_check_branch
          %282 = sbr.rel (%p280) target = $region36
        $region35: #{tpu_custom_call.1} parent=11 // pred_region
          _
        $region36: #{tpu_custom_call.1} parent=11 // pred_fallthru
          _
      $region12: #{tpu_custom_call.1} parent=5 // pred_fallthru
        _
      %p283 = scmp.lt.s32.totalorder %s20, 2
      // Predicated region
      $region37: #{tpu_custom_call.1} parent=5 // pred_check
        %p284 = pneg %p283
      $region38: #{tpu_custom_call.1} parent=5 // pred_check_branch
        %286 = sbr.rel (%p284) target = $region40
      $region39: #{tpu_custom_call.1} parent=5 // pred_region
        // Predicated region
        $region41: #{tpu_custom_call.1} parent=39 // pred_check
          %p287 = pneg %p61
        $region42: #{tpu_custom_call.1} parent=39 // pred_check_branch
          %289 = sbr.rel (%p287) target = $region44
        $region43: #{tpu_custom_call.1} parent=39 // pred_region
          %p290 = scmp.lt.s32.totalorder %s20, 1
          %s291 = scalar_select %p290, %s20, 1
          %s292 = smul.addr %s291, 8
          %s293 = scalar_lea.vmem %s1, %s292
        $region44: #{tpu_custom_call.1} parent=39 // pred_fallthru
          _
        // Predicated region
        $region45: #{tpu_custom_call.1} parent=39 // pred_check
          %p294 = pneg %p87
        $region46: #{tpu_custom_call.1} parent=39 // pred_check_branch
          %296 = sbr.rel (%p294) target = $region48
        $region47: #{tpu_custom_call.1} parent=39 // pred_region
          %p297 = scmp.lt.s32.totalorder %s20, 1
          %s298 = scalar_select %p297, %s20, 1
          %s299 = smul.addr %s298, 8
          %s300 = scalar_lea.vmem %s2, %s299
        $region48: #{tpu_custom_call.1} parent=39 // pred_fallthru
          _
      $region40: #{tpu_custom_call.1} parent=5 // pred_fallthru
        _
      %p301 = scmp.le.s32.totalorder 1, %s20
      %p302 = scmp.lt.s32.totalorder %s20, 3
      %p303 = pnand %p301, %p302
      %p304 = pneg %p303
      // Predicated region
      $region49: #{tpu_custom_call.1} parent=5 // pred_check
        _
      $region50: #{tpu_custom_call.1} parent=5 // pred_check_branch
        %306 = sbr.rel (%p303) target = $region52
      $region51: #{tpu_custom_call.1} parent=5 // pred_region
        %s307 = ssub.s32 %s20, 1
        %p308 = pneg %p41
        %p309 = pneg %p38
        %p310 = scmp.lt.s32.totalorder %s25, 1
        %s311 = scalar_select %p310, %s25, 1
        %s312 = smul.addr %s311, 8
        %s313 = scalar_lea.vmem %s1, %s312
        %p314 = pneg %p67
        %p315 = pneg %p64
        %p316 = scmp.lt.s32.totalorder %s25, 1
        %s317 = scalar_select %p316, %s25, 1
        %s318 = smul.addr %s317, 8
        %s319 = scalar_lea.vmem %s2, %s318
        %p320 = pneg %p93
        %p321 = pneg %p90
        %p322 = pneg %p114
        %p323 = pneg %p111
        %p324 = pneg %p135
        %p325 = pneg %p132
        %p326 = pneg %p156
        %p327 = pneg %p153
        %p328 = pneg %p177
        %p329 = pneg %p174
        %p330 = pneg %p198
        %p331 = pneg %p195
        %p332 = pneg %p224
        %p333 = pneg %p221
        %s334 = sand.u32 %s211, 1
        %s335 = scalar_lea.sflag [#allocation4], %s334
        %s336 = sand.u32 %s211, 1
        %s337 = smul.addr %s336, 8
        %s338 = scalar_lea.vmem [#allocation3], %s337
        %p339 = pneg %p250
        %p340 = pneg %p247
        %p341 = scmp.lt.s32.totalorder %s25, 1
        %s342 = scalar_select %p341, %s25, 1
        %s343 = smul.addr %s342, 8
        %s344 = scalar_lea.vmem %s9, %s343
        %p345 = scmp.lt.s32.totalorder %s25, 1
        %s346 = scalar_select %p345, %s25, 1
        %s347 = smul.addr %s346, 8
        %s348 = scalar_lea.vmem %s1, %s347
        %p349 = scmp.lt.s32.totalorder %s25, 1
        %s350 = scalar_select %p349, %s25, 1
        %s351 = smul.addr %s350, 8
        %s352 = scalar_lea.vmem %s2, %s351
        %p353 = scmp.lt.s32.totalorder %s25, 1
        %s354 = scalar_select %p353, %s25, 1
        %s355 = smul.addr %s354, 8
        %s356 = scalar_lea.vmem %s9, %s355
        %s357 = sld [smem:[#allocation2]]
        %v358 = vld [vmem:[%s348] sm:$0xff]
        %v359 = vld [vmem:[%s352] sm:$0xff]
        %v360 = vld [vmem:[%s3] sm:$0xff]
        %v361 = vld [vmem:[%s3 + $0x8] sm:$0xff]
        %v362 = vld [vmem:[%s3 + $0x10] sm:$0xff]
        %v363 = vld [vmem:[%s3 + $0x18] sm:$0xff]
        %v364 = vld [vmem:[%s6] sm:$0xff]
        %v365 = vld [vmem:[%s6 + $0x8] sm:$0xff]
        %v366 = vld [vmem:[%s6 + $0x10] sm:$0xff]
        %v367 = vld [vmem:[%s6 + $0x18] sm:$0xff]
        %v368 = vld [vmem:[%s6 + $0x20] sm:$0xff]
        %v369 = vld [vmem:[%s6 + $0x28] sm:$0xff]
        %v370 = vld [vmem:[%s6 + $0x30] sm:$0xff]
        %v371 = vld [vmem:[%s6 + $0x38] sm:$0xff]
        %v372 = vld [vmem:[%s4] sm:$0x1]
        %v373 = vld [vmem:[%s5] sm:$0x1]
        %v374 = vstv %s357
        %v375 = vmul.f32 %v374, %v373
        %v376 = vadd.f32 %v372, %v375
        %v378 = vlaneseq
        %v379 = vshrl.u32 %v378, 7
        %v380 = vsub.s32 0, %v379
        %v381 = vrot.slane %v376, %v380
        %vm383 = vcmask 261120
        %v385 = vsel %vm383, %v358, 0
        %387 = vmatprep.subr.mxu0 0.0
        %388 = vmatpush1.msra.mxu0 0.0
        %389 = vmatprep.subr.mxu0 0.0
        %390 = vmatpush1.msra.mxu0 0.0
        %391 = vmatprep.subr.mxu0 0.0
        %392 = vmatpush1.msra.mxu0 0.0
        %393 = vmatprep.subr.mxu0 0.0
        %394 = vmatpush1.msra.mxu0 0.0
        %395 = vmatprep.subr.mxu0 0.0
        %396 = vmatpush1.msra.mxu0 0.0
        %397 = vmatprep.subr.mxu0 0.0
        %398 = vmatpush1.msra.mxu0 0.0
        %399 = vmatprep.subr.mxu0 0.0
        %400 = vmatpush1.msra.mxu0 0.0
        %401 = vmatprep.subr.mxu0 0.0
        %402 = vmatpush1.msra.mxu0 0.0
        %403 = vmatprep.subr.mxu0 0.0
        %404 = vmatpush1.msra.mxu0 0.0
        %405 = vmatprep.subr.mxu0 0.0
        %406 = vmatpush1.msra.mxu0 0.0
        %407 = vmatprep.subr.mxu0 0.0
        %408 = vmatpush1.msra.mxu0 0.0
        %409 = vmatprep.subr.mxu0 0.0
        %410 = vmatpush1.msra.mxu0 0.0
        %411 = vmatprep.subr.mxu0 0.0
        %412 = vmatpush1.msra.mxu0 %v363
        %413 = vmatprep.subr.mxu0 0.0
        %414 = vmatpush1.msra.mxu0 %v362
        %415 = vmatprep.subr.mxu0 0.0
        %416 = vmatpush1.msra.mxu0 %v361
        %417 = vmatprep.subr.mxu0 0.0
        %418 = vmatpush1.msra.mxu0 %v360
        %419 = vmatprep.subr.mxu0 0.0
        %420 = vmatpush2.msra.mxu0 0.0
        %421 = vmatprep.subr.mxu0 0.0
        %422 = vmatpush2.msra.mxu0 0.0
        %423 = vmatprep.subr.mxu0 0.0
        %424 = vmatpush2.msra.mxu0 0.0
        %425 = vmatprep.subr.mxu0 0.0
        %426 = vmatpush2.msra.mxu0 0.0
        %427 = vmatprep.subr.mxu0 0.0
        %428 = vmatpush2.msra.mxu0 0.0
        %429 = vmatprep.subr.mxu0 0.0
        %430 = vmatpush2.msra.mxu0 0.0
        %431 = vmatprep.subr.mxu0 0.0
        %432 = vmatpush2.msra.mxu0 0.0
        %433 = vmatprep.subr.mxu0 0.0
        %434 = vmatpush2.msra.mxu0 0.0
        %435 = vmatprep.subr.mxu0 0.0
        %436 = vmatpush2.msra.mxu0 0.0
        %437 = vmatprep.subr.mxu0 0.0
        %438 = vmatpush2.msra.mxu0 0.0
        %439 = vmatprep.subr.mxu0 0.0
        %440 = vmatpush2.msra.mxu0 0.0
        %441 = vmatprep.subr.mxu0 0.0
        %442 = vmatpush2.msra.mxu0 0.0
        %443 = vmatprep.subr.mxu0 0.0
        %444 = vmatpush2.msra.mxu0 0.0
        %445 = vmatprep.subr.mxu0 0.0
        %446 = vmatpush2.msra.mxu0 0.0
        %447 = vmatprep.subr.mxu0 0.0
        %448 = vmatpush2.msra.mxu0 0.0
        %449 = vmatprep.subr.mxu0 0.0
        %450 = vmatpush2.msra.mxu0 0.0
        %451 = vmatprep.mubr.f32.mxu0 0.0
        %452 = vmatmul.mubr.f32.gmra.mxu0 %v385
        %v453 = vpop.f32.mrf.mxu0
        %v454 = vadd.f32 %v381, %v453
        %v455 = vpop.f32.mrf.mxu0
        %456 = vdwg.mxu0
        %v458 = vsel %vm383, %v359, 0
        %460 = vmatprep.subr.mxu0 0.0
        %461 = vmatpush1.msra.mxu0 0.0
        %462 = vmatprep.subr.mxu0 0.0
        %463 = vmatpush1.msra.mxu0 0.0
        %464 = vmatprep.subr.mxu0 0.0
        %465 = vmatpush1.msra.mxu0 0.0
        %466 = vmatprep.subr.mxu0 0.0
        %467 = vmatpush1.msra.mxu0 0.0
        %468 = vmatprep.subr.mxu0 0.0
        %469 = vmatpush1.msra.mxu0 0.0
        %470 = vmatprep.subr.mxu0 0.0
        %471 = vmatpush1.msra.mxu0 0.0
        %472 = vmatprep.subr.mxu0 0.0
        %473 = vmatpush1.msra.mxu0 0.0
        %474 = vmatprep.subr.mxu0 0.0
        %475 = vmatpush1.msra.mxu0 0.0
        %476 = vmatprep.subr.mxu0 0.0
        %477 = vmatpush1.msra.mxu0 0.0
        %478 = vmatprep.subr.mxu0 0.0
        %479 = vmatpush1.msra.mxu0 0.0
        %480 = vmatprep.subr.mxu0 0.0
        %481 = vmatpush1.msra.mxu0 0.0
        %482 = vmatprep.subr.mxu0 0.0
        %483 = vmatpush1.msra.mxu0 0.0
        %484 = vmatprep.subr.mxu0 0.0
        %485 = vmatpush1.msra.mxu0 %v363
        %486 = vmatprep.subr.mxu0 0.0
        %487 = vmatpush1.msra.mxu0 %v362
        %488 = vmatprep.subr.mxu0 0.0
        %489 = vmatpush1.msra.mxu0 %v361
        %490 = vmatprep.subr.mxu0 0.0
        %491 = vmatpush1.msra.mxu0 %v360
        %492 = vmatprep.subr.mxu0 0.0
        %493 = vmatpush2.msra.mxu0 0.0
        %494 = vmatprep.subr.mxu0 0.0
        %495 = vmatpush2.msra.mxu0 0.0
        %496 = vmatprep.subr.mxu0 0.0
        %497 = vmatpush2.msra.mxu0 0.0
        %498 = vmatprep.subr.mxu0 0.0
        %499 = vmatpush2.msra.mxu0 0.0
        %500 = vmatprep.subr.mxu0 0.0
        %501 = vmatpush2.msra.mxu0 0.0
        %502 = vmatprep.subr.mxu0 0.0
        %503 = vmatpush2.msra.mxu0 0.0
        %504 = vmatprep.subr.mxu0 0.0
        %505 = vmatpush2.msra.mxu0 0.0
        %506 = vmatprep.subr.mxu0 0.0
        %507 = vmatpush2.msra.mxu0 0.0
        %508 = vmatprep.subr.mxu0 0.0
        %509 = vmatpush2.msra.mxu0 0.0
        %510 = vmatprep.subr.mxu0 0.0
        %511 = vmatpush2.msra.mxu0 0.0
        %512 = vmatprep.subr.mxu0 0.0
        %513 = vmatpush2.msra.mxu0 0.0
        %514 = vmatprep.subr.mxu0 0.0
        %515 = vmatpush2.msra.mxu0 0.0
        %516 = vmatprep.subr.mxu0 0.0
        %517 = vmatpush2.msra.mxu0 0.0
        %518 = vmatprep.subr.mxu0 0.0
        %519 = vmatpush2.msra.mxu0 0.0
        %520 = vmatprep.subr.mxu0 0.0
        %521 = vmatpush2.msra.mxu0 0.0
        %522 = vmatprep.subr.mxu0 0.0
        %523 = vmatpush2.msra.mxu0 0.0
        %524 = vmatprep.mubr.f32.mxu0 0.0
        %525 = vmatmul.mubr.f32.gmra.mxu0 %v458
        %v526 = vpop.f32.mrf.mxu0
        %v527 = vadd.f32 0.0, %v526
        %v528 = vpop.f32.mrf.mxu0
        %529 = vdwg.mxu0
        %v530 = vtanh.pop %v454
        %v531 = vmul.f32 %v530, %v530
        %v532 = vsub.f32 1.0, %v531
        %v533 = vmul.f32 %v527, %v532
        %v534 = vld [vmem:[%s7] sm:$0x1]
        %v536 = vlaneseq
        %v537 = vshrl.u32 %v536, 7
        %v538 = vsub.s32 0, %v537
        %v539 = vrot.slane %v534, %v538
        %vm541 = vcmask 523264
        %v543 = vsel %vm541, %v530, 0
        %545 = vmatprep.subr.mxu0 0.0
        %546 = vmatpush1.msra.mxu0 0.0
        %547 = vmatprep.subr.mxu0 0.0
        %548 = vmatpush1.msra.mxu0 0.0
        %549 = vmatprep.subr.mxu0 0.0
        %550 = vmatpush1.msra.mxu0 0.0
        %551 = vmatprep.subr.mxu0 0.0
        %552 = vmatpush1.msra.mxu0 0.0
        %553 = vmatprep.subr.mxu0 0.0
        %554 = vmatpush1.msra.mxu0 0.0
        %555 = vmatprep.subr.mxu0 0.0
        %556 = vmatpush1.msra.mxu0 0.0
        %557 = vmatprep.subr.mxu0 0.0
        %558 = vmatpush1.msra.mxu0 0.0
        %559 = vmatprep.subr.mxu0 0.0
        %560 = vmatpush1.msra.mxu0 0.0
        %561 = vmatprep.subr.mxu0 0.0
        %562 = vmatpush1.msra.mxu0 %v371
        %563 = vmatprep.subr.mxu0 0.0
        %564 = vmatpush1.msra.mxu0 %v370
        %565 = vmatprep.subr.mxu0 0.0
        %566 = vmatpush1.msra.mxu0 %v369
        %567 = vmatprep.subr.mxu0 0.0
        %568 = vmatpush1.msra.mxu0 %v368
        %569 = vmatprep.subr.mxu0 0.0
        %570 = vmatpush1.msra.mxu0 %v367
        %571 = vmatprep.subr.mxu0 0.0
        %572 = vmatpush1.msra.mxu0 %v366
        %573 = vmatprep.subr.mxu0 0.0
        %574 = vmatpush1.msra.mxu0 %v365
        %575 = vmatprep.subr.mxu0 0.0
        %576 = vmatpush1.msra.mxu0 %v364
        %577 = vmatprep.subr.mxu0 0.0
        %578 = vmatpush2.msra.mxu0 0.0
        %579 = vmatprep.subr.mxu0 0.0
        %580 = vmatpush2.msra.mxu0 0.0
        %581 = vmatprep.subr.mxu0 0.0
        %582 = vmatpush2.msra.mxu0 0.0
        %583 = vmatprep.subr.mxu0 0.0
        %584 = vmatpush2.msra.mxu0 0.0
        %585 = vmatprep.subr.mxu0 0.0
        %586 = vmatpush2.msra.mxu0 0.0
        %587 = vmatprep.subr.mxu0 0.0
        %588 = vmatpush2.msra.mxu0 0.0
        %589 = vmatprep.subr.mxu0 0.0
        %590 = vmatpush2.msra.mxu0 0.0
        %591 = vmatprep.subr.mxu0 0.0
        %592 = vmatpush2.msra.mxu0 0.0
        %593 = vmatprep.subr.mxu0 0.0
        %594 = vmatpush2.msra.mxu0 0.0
        %595 = vmatprep.subr.mxu0 0.0
        %596 = vmatpush2.msra.mxu0 0.0
        %597 = vmatprep.subr.mxu0 0.0
        %598 = vmatpush2.msra.mxu0 0.0
        %599 = vmatprep.subr.mxu0 0.0
        %600 = vmatpush2.msra.mxu0 0.0
        %601 = vmatprep.subr.mxu0 0.0
        %602 = vmatpush2.msra.mxu0 0.0
        %603 = vmatprep.subr.mxu0 0.0
        %604 = vmatpush2.msra.mxu0 0.0
        %605 = vmatprep.subr.mxu0 0.0
        %606 = vmatpush2.msra.mxu0 0.0
        %607 = vmatprep.subr.mxu0 0.0
        %608 = vmatpush2.msra.mxu0 0.0
        %609 = vmatprep.mubr.f32.mxu0 0.0
        %610 = vmatmul.mubr.f32.gmra.mxu0 %v543
        %v611 = vpop.f32.mrf.mxu0
        %v612 = vadd.f32 %v539, %v611
        %v613 = vpop.f32.mrf.mxu0
        %614 = vdwg.mxu0
        %v616 = vsel %vm541, %v533, 0
        %618 = vmatprep.subr.mxu0 0.0
        %619 = vmatpush1.msra.mxu0 0.0
        %620 = vmatprep.subr.mxu0 0.0
        %621 = vmatpush1.msra.mxu0 0.0
        %622 = vmatprep.subr.mxu0 0.0
        %623 = vmatpush1.msra.mxu0 0.0
        %624 = vmatprep.subr.mxu0 0.0
        %625 = vmatpush1.msra.mxu0 0.0
        %626 = vmatprep.subr.mxu0 0.0
        %627 = vmatpush1.msra.mxu0 0.0
        %628 = vmatprep.subr.mxu0 0.0
        %629 = vmatpush1.msra.mxu0 0.0
        %630 = vmatprep.subr.mxu0 0.0
        %631 = vmatpush1.msra.mxu0 0.0
        %632 = vmatprep.subr.mxu0 0.0
        %633 = vmatpush1.msra.mxu0 0.0
        %634 = vmatprep.subr.mxu0 0.0
        %635 = vmatpush1.msra.mxu0 %v371
        %636 = vmatprep.subr.mxu0 0.0
        %637 = vmatpush1.msra.mxu0 %v370
        %638 = vmatprep.subr.mxu0 0.0
        %639 = vmatpush1.msra.mxu0 %v369
        %640 = vmatprep.subr.mxu0 0.0
        %641 = vmatpush1.msra.mxu0 %v368
        %642 = vmatprep.subr.mxu0 0.0
        %643 = vmatpush1.msra.mxu0 %v367
        %644 = vmatprep.subr.mxu0 0.0
        %645 = vmatpush1.msra.mxu0 %v366
        %646 = vmatprep.subr.mxu0 0.0
        %647 = vmatpush1.msra.mxu0 %v365
        %648 = vmatprep.subr.mxu0 0.0
        %649 = vmatpush1.msra.mxu0 %v364
        %650 = vmatprep.subr.mxu0 0.0
        %651 = vmatpush2.msra.mxu0 0.0
        %652 = vmatprep.subr.mxu0 0.0
        %653 = vmatpush2.msra.mxu0 0.0
        %654 = vmatprep.subr.mxu0 0.0
        %655 = vmatpush2.msra.mxu0 0.0
        %656 = vmatprep.subr.mxu0 0.0
        %657 = vmatpush2.msra.mxu0 0.0
        %658 = vmatprep.subr.mxu0 0.0
        %659 = vmatpush2.msra.mxu0 0.0
        %660 = vmatprep.subr.mxu0 0.0
        %661 = vmatpush2.msra.mxu0 0.0
        %662 = vmatprep.subr.mxu0 0.0
        %663 = vmatpush2.msra.mxu0 0.0
        %664 = vmatprep.subr.mxu0 0.0
        %665 = vmatpush2.msra.mxu0 0.0
        %666 = vmatprep.subr.mxu0 0.0
        %667 = vmatpush2.msra.mxu0 0.0
        %668 = vmatprep.subr.mxu0 0.0
        %669 = vmatpush2.msra.mxu0 0.0
        %670 = vmatprep.subr.mxu0 0.0
        %671 = vmatpush2.msra.mxu0 0.0
        %672 = vmatprep.subr.mxu0 0.0
        %673 = vmatpush2.msra.mxu0 0.0
        %674 = vmatprep.subr.mxu0 0.0
        %675 = vmatpush2.msra.mxu0 0.0
        %676 = vmatprep.subr.mxu0 0.0
        %677 = vmatpush2.msra.mxu0 0.0
        %678 = vmatprep.subr.mxu0 0.0
        %679 = vmatpush2.msra.mxu0 0.0
        %680 = vmatprep.subr.mxu0 0.0
        %681 = vmatpush2.msra.mxu0 0.0
        %682 = vmatprep.mubr.f32.mxu0 0.0
        %683 = vmatmul.mubr.f32.gmra.mxu0 %v616
        %v684 = vpop.f32.mrf.mxu0
        %v685 = vadd.f32 0.0, %v684
        %v686 = vpop.f32.mrf.mxu0
        %687 = vdwg.mxu0
        %688 = vst.msk [vmem:[%s338] sm:$0xff] %vm383, %v612
        %v689 = vmul.f32 %v685, %v359
        %v690 = vsel %vm383, %v689, 0.0
        %691 = vadd.xlane.f32.xlu0 %v690
        %v692 = vpop.xlane.xlu0 %691
        %v693 = vsub.f32 0.0, %v692
        %vm694 = vcmask 7168
        %695 = vst.msk [vmem:[%s356] sm:$0xff] %vm694, %v693
        %s696 = sand.u32 %s211, 1
        %s697 = scalar_lea.sflag [#allocation4], %s696
        %s698 = sand.u32 %s211, 1
        %s699 = smul.addr %s698, 8
        %s700 = scalar_lea.vmem [#allocation3], %s699
        %p701 = scmp.lt.s32.totalorder %s25, 1
        %s702 = scalar_select %p701, %s25, 1
        %s703 = smul.addr %s702, 8
        %s704 = scalar_lea.vmem %s9, %s703
        // Predicated region
        $region53: #{tpu_custom_call.1} parent=51 // pred_check
          %p705 = pneg %p221
        $region54: #{tpu_custom_call.1} parent=51 // pred_check_branch
          %707 = sbr.rel (%p705) target = $region56
        $region55: #{tpu_custom_call.1} parent=51 // pred_region
          %s709 = ssub.s32 128, 128
          %710 = vsyncadd %s697, %s709
          %s711 = smul.addr %s25, 128
          %s712 = scalar_lea.hbm %s8, %s711
          %s714 = sshll.u32 %s700, 4
          %s715 = int_to_ptr.vmem [resolvable:$true] %s714
          %717 = dma.vmem_to_hbm [thread:$0]  %s715, 128, %s712, %s697
        $region56: #{tpu_custom_call.1} parent=51 // pred_fallthru
          _
        // Predicated region
        $region57: #{tpu_custom_call.1} parent=51 // pred_check
          %p718 = pneg %p247
        $region58: #{tpu_custom_call.1} parent=51 // pred_check_branch
          %720 = sbr.rel (%p718) target = $region60
        $region59: #{tpu_custom_call.1} parent=51 // pred_region
          _
        $region60: #{tpu_custom_call.1} parent=51 // pred_fallthru
          _
      $region52: #{tpu_custom_call.1} parent=5 // pred_fallthru
        _
      %p721 = scmp.le.s32.totalorder 2, %s20
      // Predicated region
      $region61: #{tpu_custom_call.1} parent=5 // pred_check
        %p722 = pneg %p721
      $region62: #{tpu_custom_call.1} parent=5 // pred_check_branch
        %724 = sbr.rel (%p722) target = $region64
      $region63: #{tpu_custom_call.1} parent=5 // pred_region
        %s725 = ssub.s32 %s20, 2
        // Predicated region
        $region65: #{tpu_custom_call.1} parent=63 // pred_check
          %p726 = pneg %p227
        $region66: #{tpu_custom_call.1} parent=63 // pred_check_branch
          %728 = sbr.rel (%p726) target = $region68
        $region67: #{tpu_custom_call.1} parent=63 // pred_region
          %s729 = sand.u32 %s212, 1
          %s730 = scalar_lea.sflag [#allocation4], %s729
          %s731 = sand.u32 %s212, 1
          %s732 = smul.addr %s731, 8
          %s733 = scalar_lea.vmem [#allocation3], %s732
          %734 = dma.done %s730, 128
        $region68: #{tpu_custom_call.1} parent=63 // pred_fallthru
          _
        // Predicated region
        $region69: #{tpu_custom_call.1} parent=63 // pred_check
          %p735 = pneg %p253
        $region70: #{tpu_custom_call.1} parent=63 // pred_check_branch
          %737 = sbr.rel (%p735) target = $region72
        $region71: #{tpu_custom_call.1} parent=63 // pred_region
          %p738 = scmp.lt.s32.totalorder %s26, 1
          %s739 = scalar_select %p738, %s26, 1
          %s740 = smul.addr %s739, 8
          %s741 = scalar_lea.vmem %s9, %s740
        $region72: #{tpu_custom_call.1} parent=63 // pred_fallthru
          _
      $region64: #{tpu_custom_call.1} parent=5 // pred_fallthru
        _
    $region6: #{tpu_custom_call.1} parent=1 // loop_footer
      %s24 = sadd.s32 1, %s20
    $region7: #{tpu_custom_call.1} parent=1 // loop_footer_branch
      %19 = sbr.rel target = $region3
    $region8: #{tpu_custom_call.1} parent=1 // loop_exit
      _
    %742 = vsyncpa [#allocation4], 1
    %s743 = scalar_lea.sflag [#allocation4], 1
    %744 = vsyncpa %s743, 1

</llo_original>
